<compile_context>
chip_gen: v6e
topology: v6e:2x2x1
jax: 0.10.0
libtpu: 0.0.40
codegen_flags: <defaults>
</compile_context>

<pallas_src>
import math

import jax
import jax.numpy as jnp
from jax import lax
from jax.experimental import pallas as pl
from jax.experimental.pallas import tpu as pltpu


def _make_kernel(B, S, D):
    scale = 1.0 / math.sqrt(D)

    def kernel(x_ref, wq_ref, wk_ref, wv_ref, bq_ref, bk_ref, bv_ref,
               wo_ref, bo_ref, o_ref, attn_ref):
        # ---- Batched QKV projections: one M = B*S matmul per tensor, each
        # producing a lane-dense (B*S, D) result (no lane slicing). ----
        x = x_ref[...]                                           # (B*S, D)
        q = jnp.dot(x, wq_ref[...], preferred_element_type=jnp.float32) + bq_ref[...]
        k = jnp.dot(x, wk_ref[...], preferred_element_type=jnp.float32) + bk_ref[...]
        v = jnp.dot(x, wv_ref[...], preferred_element_type=jnp.float32) + bv_ref[...]

        # ---- Attention core: per batch (sequence mixing stays within a batch).
        # B is tiny and static, so this unrolls at trace time. ----
        for b in range(B):
            lo, hi = b * S, (b + 1) * S
            q_b = q[lo:hi, :]                                    # (S, D)
            k_b = k[lo:hi, :]
            v_b = v[lo:hi, :]
            # 'qd,kd->qk' contraction: no explicit transpose of k.
            s = lax.dot_general(
                q_b, k_b,
                dimension_numbers=(((1,), (1,)), ((), ())),
                preferred_element_type=jnp.float32) * scale      # (S, S)
            # Numerically-stable softmax; reciprocal on the EUP (approx).
            s = s - jnp.max(s, axis=-1, keepdims=True)
            p = jnp.exp(s)
            inv = pl.reciprocal(jnp.sum(p, axis=-1, keepdims=True), approx=True)
            p = p * inv
            # attention_dropout: identity in eval mode.
            attn_ref[lo:hi, :] = jnp.dot(
                p.astype(v_b.dtype), v_b, preferred_element_type=jnp.float32)

        # ---- Output projection, batched over all B*S rows. ----
        out = jnp.dot(attn_ref[...], wo_ref[...],
                      preferred_element_type=jnp.float32) + bo_ref[...]
        o_ref[...] = out.astype(o_ref.dtype)

    return kernel


def self_attention_v3(x, w_qkv, b_qkv, w_out, b_out):
    """x: (B, S, D); w_qkv: (D, 3D); b_qkv: (3D,); w_out: (D, D); b_out: (D,)."""
    B, S, D = x.shape
    M = B * S

    # Split the fused QKV weight in the wrapper so each in-kernel matmul output
    # is lane-dense (avoids slicing inside an (8,128) vreg tile when D % 128 != 0).
    w_q = w_qkv[:, :D]
    w_k = w_qkv[:, D:2 * D]
    w_v = w_qkv[:, 2 * D:]
    b_q = b_qkv[:D].reshape(1, D)
    b_k = b_qkv[D:2 * D].reshape(1, D)
    b_v = b_qkv[2 * D:].reshape(1, D)
    b_o = b_out.reshape(1, D)

    # Flatten batch into the M dimension for the projections.
    x2d = x.reshape(M, D)

    flops = 2 * M * D * (3 * D) + B * (4 * S * S * D) + 2 * M * D * D
    transcendentals = B * S * S
    bytes_accessed = 4 * (2 * M * D + 4 * D * D + 4 * D)

    def full2d(shape):
        return pl.BlockSpec(shape, lambda i: (0, 0))

    out2d = pl.pallas_call(
        _make_kernel(B, S, D),
        out_shape=jax.ShapeDtypeStruct((M, D), x.dtype),
        grid_spec=pltpu.PrefetchScalarGridSpec(
            num_scalar_prefetch=0,
            grid=(1,),
            in_specs=[
                full2d((M, D)),       # x (flattened to B*S rows)
                full2d((D, D)),       # W_q
                full2d((D, D)),       # W_k
                full2d((D, D)),       # W_v
                full2d((1, D)),       # b_q
                full2d((1, D)),       # b_k
                full2d((1, D)),       # b_v
                full2d((D, D)),       # W_out
                full2d((1, D)),       # b_out
            ],
            out_specs=full2d((M, D)),
            scratch_shapes=[pltpu.VMEM((M, D), jnp.float32)],
        ),
        compiler_params=pltpu.CompilerParams(
            dimension_semantics=("arbitrary",),
        ),
        cost_estimate=pl.CostEstimate(
            flops=flops,
            transcendentals=transcendentals,
            bytes_accessed=bytes_accessed,
        ),
    )(x2d, w_q, w_k, w_v, b_q, b_k, b_v, w_out, b_o)

    return out2d.reshape(B, S, D)


def _reference(x, w_qkv, b_qkv, w_out, b_out):
    D = x.shape[-1]
    qkv = jnp.einsum("bsd,de->bse", x, w_qkv) + b_qkv
    q, k, v = qkv[..., :D], qkv[..., D:2 * D], qkv[..., 2 * D:]
    s = jnp.einsum("bqd,bkd->bqk", q, k) / math.sqrt(D)
    p = jax.nn.softmax(s, axis=-1)
    a = jnp.einsum("bqk,bkd->bqd", p, v)
    return jnp.einsum("bsd,de->bse", a, w_out) + b_out


if __name__ == "__main__":
    B, S, D = 2, 8, 32  # batch, seq, hidden_dim

    key = jax.random.PRNGKey(0)
    kx, kw1, kb1, kw2, kb2 = jax.random.split(key, 5)

    x = jax.random.normal(kx, (B, S, D), dtype=jnp.float32)

    # Deterministic parameter init (uniform, like nn.Linear default bounds).
    bound = 1.0 / math.sqrt(D)
    # PyTorch nn.Linear weight is (out, in); store pre-transposed (in, out).
    w_qkv = jax.random.uniform(kw1, (D, 3 * D), jnp.float32, -bound, bound)
    b_qkv = jax.random.uniform(kb1, (3 * D,), jnp.float32, -bound, bound)
    w_out = jax.random.uniform(kw2, (D, D), jnp.float32, -bound, bound)
    b_out = jax.random.uniform(kb2, (D,), jnp.float32, -bound, bound)

    out = jax.block_until_ready(self_attention_v3(x, w_qkv, b_qkv, w_out, b_out))
    ref = _reference(x, w_qkv, b_qkv, w_out, b_out)

    assert out.shape == (B, S, D)
    # Tolerance slightly relaxed because the softmax denom uses the EUP
    # approximate reciprocal (pl.reciprocal(..., approx=True)).
    assert jnp.allclose(out, ref, atol=2e-3, rtol=2e-3), "mismatch vs reference"

    print("KERNEL_OK")
</pallas_src>

<mosaic_0001>
module attributes {stable_mosaic.version = 11 : i64} {
  func.func @kernel(%arg0: i32, %arg1: memref<16x32xf32, #tpu.memory_space<vmem>>, %arg2: memref<32x32xf32, #tpu.memory_space<vmem>>, %arg3: memref<32x32xf32, #tpu.memory_space<vmem>>, %arg4: memref<32x32xf32, #tpu.memory_space<vmem>>, %arg5: memref<1x32xf32, #tpu.memory_space<vmem>>, %arg6: memref<1x32xf32, #tpu.memory_space<vmem>>, %arg7: memref<1x32xf32, #tpu.memory_space<vmem>>, %arg8: memref<32x32xf32, #tpu.memory_space<vmem>>, %arg9: memref<1x32xf32, #tpu.memory_space<vmem>>, %arg10: memref<16x32xf32, #tpu.memory_space<vmem>>, %arg11: memref<16x32xf32, #tpu.memory_space<vmem>>) attributes {dimension_semantics = [#tpu.dimension_semantics<arbitrary>], iteration_bounds = array<i64: 1>, scalar_prefetch = 0 : i64, scratch_operands = 1 : i64, tpu.core_type = #tpu.core_type<tc>, window_params = [{pipeline_mode = #tpu.pipeline_mode<synchronous>, transform_indices = @transform_0, window_bounds = array<i64: 16, 32>}, {pipeline_mode = #tpu.pipeline_mode<synchronous>, transform_indices = @transform_1, window_bounds = array<i64: 32, 32>}, {pipeline_mode = #tpu.pipeline_mode<synchronous>, transform_indices = @transform_2, window_bounds = array<i64: 32, 32>}, {pipeline_mode = #tpu.pipeline_mode<synchronous>, transform_indices = @transform_3, window_bounds = array<i64: 32, 32>}, {pipeline_mode = #tpu.pipeline_mode<synchronous>, transform_indices = @transform_4, window_bounds = array<i64: 1, 32>}, {pipeline_mode = #tpu.pipeline_mode<synchronous>, transform_indices = @transform_5, window_bounds = array<i64: 1, 32>}, {pipeline_mode = #tpu.pipeline_mode<synchronous>, transform_indices = @transform_6, window_bounds = array<i64: 1, 32>}, {pipeline_mode = #tpu.pipeline_mode<synchronous>, transform_indices = @transform_7, window_bounds = array<i64: 32, 32>}, {pipeline_mode = #tpu.pipeline_mode<synchronous>, transform_indices = @transform_8, window_bounds = array<i64: 1, 32>}, {pipeline_mode = #tpu.pipeline_mode<synchronous>, transform_indices = @transform_9, window_bounds = array<i64: 16, 32>}]} {
    %c0 = arith.constant 0 : index
    %c0_0 = arith.constant 0 : index
    %0 = vector.load %arg1[%c0, %c0_0] : memref<16x32xf32, #tpu.memory_space<vmem>>, vector<16x32xf32>
    %c0_1 = arith.constant 0 : index
    %c0_2 = arith.constant 0 : index
    %1 = vector.load %arg2[%c0_1, %c0_2] : memref<32x32xf32, #tpu.memory_space<vmem>>, vector<32x32xf32>
    %cst = arith.constant dense<0.000000e+00> : vector<16x32xf32>
    %2 = tpu.matmul %0, %1, %cst {dimension_numbers = #tpu.dot_dimension_numbers<[1], [0], [0], [1], [0, 0, 1, 1], [], []>} : vector<16x32xf32>, vector<32x32xf32>, vector<16x32xf32> -> vector<16x32xf32>
    %c0_3 = arith.constant 0 : index
    %c0_4 = arith.constant 0 : index
    %3 = vector.load %arg5[%c0_3, %c0_4] : memref<1x32xf32, #tpu.memory_space<vmem>>, vector<1x32xf32>
    %4 = vector.broadcast %3 : vector<1x32xf32> to vector<16x32xf32>
    %5 = arith.addf %2, %4 : vector<16x32xf32>
    %c0_5 = arith.constant 0 : index
    %c0_6 = arith.constant 0 : index
    %6 = vector.load %arg3[%c0_5, %c0_6] : memref<32x32xf32, #tpu.memory_space<vmem>>, vector<32x32xf32>
    %cst_7 = arith.constant dense<0.000000e+00> : vector<16x32xf32>
    %7 = tpu.matmul %0, %6, %cst_7 {dimension_numbers = #tpu.dot_dimension_numbers<[1], [0], [0], [1], [0, 0, 1, 1], [], []>} : vector<16x32xf32>, vector<32x32xf32>, vector<16x32xf32> -> vector<16x32xf32>
    %c0_8 = arith.constant 0 : index
    %c0_9 = arith.constant 0 : index
    %8 = vector.load %arg6[%c0_8, %c0_9] : memref<1x32xf32, #tpu.memory_space<vmem>>, vector<1x32xf32>
    %9 = vector.broadcast %8 : vector<1x32xf32> to vector<16x32xf32>
    %10 = arith.addf %7, %9 : vector<16x32xf32>
    %c0_10 = arith.constant 0 : index
    %c0_11 = arith.constant 0 : index
    %11 = vector.load %arg4[%c0_10, %c0_11] : memref<32x32xf32, #tpu.memory_space<vmem>>, vector<32x32xf32>
    %cst_12 = arith.constant dense<0.000000e+00> : vector<16x32xf32>
    %12 = tpu.matmul %0, %11, %cst_12 {dimension_numbers = #tpu.dot_dimension_numbers<[1], [0], [0], [1], [0, 0, 1, 1], [], []>} : vector<16x32xf32>, vector<32x32xf32>, vector<16x32xf32> -> vector<16x32xf32>
    %c0_13 = arith.constant 0 : index
    %c0_14 = arith.constant 0 : index
    %13 = vector.load %arg7[%c0_13, %c0_14] : memref<1x32xf32, #tpu.memory_space<vmem>>, vector<1x32xf32>
    %14 = vector.broadcast %13 : vector<1x32xf32> to vector<16x32xf32>
    %15 = arith.addf %12, %14 : vector<16x32xf32>
    %16 = vector.extract_strided_slice %5 {offsets = [0, 0], sizes = [8, 32], strides = [1, 1]} : vector<16x32xf32> to vector<8x32xf32>
    %17 = vector.extract_strided_slice %10 {offsets = [0, 0], sizes = [8, 32], strides = [1, 1]} : vector<16x32xf32> to vector<8x32xf32>
    %18 = vector.extract_strided_slice %15 {offsets = [0, 0], sizes = [8, 32], strides = [1, 1]} : vector<16x32xf32> to vector<8x32xf32>
    %cst_15 = arith.constant dense<0.000000e+00> : vector<8x8xf32>
    %19 = tpu.matmul %16, %17, %cst_15 {dimension_numbers = #tpu.dot_dimension_numbers<[1], [1], [0], [0], [0, 0, 1, 0], [], []>} : vector<8x32xf32>, vector<8x32xf32>, vector<8x8xf32> -> vector<8x8xf32>
    %cst_16 = arith.constant 0.176776692 : f32
    %20 = vector.broadcast %cst_16 : f32 to vector<8x8xf32>
    %21 = arith.mulf %19, %20 : vector<8x8xf32>
    %cst_17 = arith.constant dense<0xFF800000> : vector<8xf32>
    %22 = vector.multi_reduction <maximumf>, %21, %cst_17 [1] : vector<8x8xf32> to vector<8xf32>
    %23 = vector.shape_cast %22 : vector<8xf32> to vector<8x1xf32>
    %24 = vector.broadcast %23 : vector<8x1xf32> to vector<8x8xf32>
    %25 = arith.subf %21, %24 : vector<8x8xf32>
    %26 = math.exp %25 : vector<8x8xf32>
    %cst_18 = arith.constant dense<0.000000e+00> : vector<8xf32>
    %27 = vector.multi_reduction <add>, %26, %cst_18 [1] : vector<8x8xf32> to vector<8xf32>
    %28 = vector.shape_cast %27 : vector<8xf32> to vector<8x1xf32>
    %29 = tpu.reciprocal %28 {approx = true} : vector<8x1xf32> -> vector<8x1xf32>
    %30 = vector.broadcast %29 : vector<8x1xf32> to vector<8x8xf32>
    %31 = arith.mulf %26, %30 : vector<8x8xf32>
    %cst_19 = arith.constant dense<0.000000e+00> : vector<8x32xf32>
    %32 = tpu.matmul %31, %18, %cst_19 {dimension_numbers = #tpu.dot_dimension_numbers<[1], [0], [0], [1], [0, 0, 1, 1], [], []>} : vector<8x8xf32>, vector<8x32xf32>, vector<8x32xf32> -> vector<8x32xf32>
    %c0_20 = arith.constant 0 : index
    %c0_21 = arith.constant 0 : index
    %33 = vector.load %arg11[%c0_20, %c0_21] : memref<16x32xf32, #tpu.memory_space<vmem>>, vector<8x32xf32>
    tpu.vector_store %arg11[%c0_20, %c0_21], %32 {strides = array<i32>} : memref<16x32xf32, #tpu.memory_space<vmem>>, vector<8x32xf32>,
    %34 = vector.extract_strided_slice %5 {offsets = [8, 0], sizes = [8, 32], strides = [1, 1]} : vector<16x32xf32> to vector<8x32xf32>
    %35 = vector.extract_strided_slice %10 {offsets = [8, 0], sizes = [8, 32], strides = [1, 1]} : vector<16x32xf32> to vector<8x32xf32>
    %36 = vector.extract_strided_slice %15 {offsets = [8, 0], sizes = [8, 32], strides = [1, 1]} : vector<16x32xf32> to vector<8x32xf32>
    %cst_22 = arith.constant dense<0.000000e+00> : vector<8x8xf32>
    %37 = tpu.matmul %34, %35, %cst_22 {dimension_numbers = #tpu.dot_dimension_numbers<[1], [1], [0], [0], [0, 0, 1, 0], [], []>} : vector<8x32xf32>, vector<8x32xf32>, vector<8x8xf32> -> vector<8x8xf32>
    %cst_23 = arith.constant 0.176776692 : f32
    %38 = vector.broadcast %cst_23 : f32 to vector<8x8xf32>
    %39 = arith.mulf %37, %38 : vector<8x8xf32>
    %cst_24 = arith.constant dense<0xFF800000> : vector<8xf32>
    %40 = vector.multi_reduction <maximumf>, %39, %cst_24 [1] : vector<8x8xf32> to vector<8xf32>
    %41 = vector.shape_cast %40 : vector<8xf32> to vector<8x1xf32>
    %42 = vector.broadcast %41 : vector<8x1xf32> to vector<8x8xf32>
    %43 = arith.subf %39, %42 : vector<8x8xf32>
    %44 = math.exp %43 : vector<8x8xf32>
    %cst_25 = arith.constant dense<0.000000e+00> : vector<8xf32>
    %45 = vector.multi_reduction <add>, %44, %cst_25 [1] : vector<8x8xf32> to vector<8xf32>
    %46 = vector.shape_cast %45 : vector<8xf32> to vector<8x1xf32>
    %47 = tpu.reciprocal %46 {approx = true} : vector<8x1xf32> -> vector<8x1xf32>
    %48 = vector.broadcast %47 : vector<8x1xf32> to vector<8x8xf32>
    %49 = arith.mulf %44, %48 : vector<8x8xf32>
    %cst_26 = arith.constant dense<0.000000e+00> : vector<8x32xf32>
    %50 = tpu.matmul %49, %36, %cst_26 {dimension_numbers = #tpu.dot_dimension_numbers<[1], [0], [0], [1], [0, 0, 1, 1], [], []>} : vector<8x8xf32>, vector<8x32xf32>, vector<8x32xf32> -> vector<8x32xf32>
    %c8 = arith.constant 8 : index
    %c0_27 = arith.constant 0 : index
    %51 = vector.load %arg11[%c8, %c0_27] : memref<16x32xf32, #tpu.memory_space<vmem>>, vector<8x32xf32>
    tpu.vector_store %arg11[%c8, %c0_27], %50 {strides = array<i32>} : memref<16x32xf32, #tpu.memory_space<vmem>>, vector<8x32xf32>,
    %c0_28 = arith.constant 0 : index
    %c0_29 = arith.constant 0 : index
    %52 = vector.load %arg11[%c0_28, %c0_29] : memref<16x32xf32, #tpu.memory_space<vmem>>, vector<16x32xf32>
    %c0_30 = arith.constant 0 : index
    %c0_31 = arith.constant 0 : index
    %53 = vector.load %arg8[%c0_30, %c0_31] : memref<32x32xf32, #tpu.memory_space<vmem>>, vector<32x32xf32>
    %cst_32 = arith.constant dense<0.000000e+00> : vector<16x32xf32>
    %54 = tpu.matmul %52, %53, %cst_32 {dimension_numbers = #tpu.dot_dimension_numbers<[1], [0], [0], [1], [0, 0, 1, 1], [], []>} : vector<16x32xf32>, vector<32x32xf32>, vector<16x32xf32> -> vector<16x32xf32>
    %c0_33 = arith.constant 0 : index
    %c0_34 = arith.constant 0 : index
    %55 = vector.load %arg9[%c0_33, %c0_34] : memref<1x32xf32, #tpu.memory_space<vmem>>, vector<1x32xf32>
    %56 = vector.broadcast %55 : vector<1x32xf32> to vector<16x32xf32>
    %57 = arith.addf %54, %56 : vector<16x32xf32>
    %c0_35 = arith.constant 0 : index
    %c0_36 = arith.constant 0 : index
    %58 = vector.load %arg10[%c0_35, %c0_36] : memref<16x32xf32, #tpu.memory_space<vmem>>, vector<16x32xf32>
    tpu.vector_store %arg10[%c0_35, %c0_36], %57 {strides = array<i32>} : memref<16x32xf32, #tpu.memory_space<vmem>>, vector<16x32xf32>,
    return
  }
  func.func @transform_0(%arg0: i32) -> (i32, i32) {
    %c0_i32 = arith.constant 0 : i32
    %c0_i32_0 = arith.constant 0 : i32
    %c0_i32_1 = arith.constant 0 : i32
    return %c0_i32, %c0_i32_0 : i32, i32
  }
  func.func @transform_1(%arg0: i32) -> (i32, i32) {
    %c0_i32 = arith.constant 0 : i32
    %c0_i32_0 = arith.constant 0 : i32
    %c0_i32_1 = arith.constant 0 : i32
    return %c0_i32, %c0_i32_0 : i32, i32
  }
  func.func @transform_2(%arg0: i32) -> (i32, i32) {
    %c0_i32 = arith.constant 0 : i32
    %c0_i32_0 = arith.constant 0 : i32
    %c0_i32_1 = arith.constant 0 : i32
    return %c0_i32, %c0_i32_0 : i32, i32
  }
  func.func @transform_3(%arg0: i32) -> (i32, i32) {
    %c0_i32 = arith.constant 0 : i32
    %c0_i32_0 = arith.constant 0 : i32
    %c0_i32_1 = arith.constant 0 : i32
    return %c0_i32, %c0_i32_0 : i32, i32
  }
  func.func @transform_4(%arg0: i32) -> (i32, i32) {
    %c0_i32 = arith.constant 0 : i32
    %c0_i32_0 = arith.constant 0 : i32
    %c0_i32_1 = arith.constant 0 : i32
    return %c0_i32, %c0_i32_0 : i32, i32
  }
  func.func @transform_5(%arg0: i32) -> (i32, i32) {
    %c0_i32 = arith.constant 0 : i32
    %c0_i32_0 = arith.constant 0 : i32
    %c0_i32_1 = arith.constant 0 : i32
    return %c0_i32, %c0_i32_0 : i32, i32
  }
  func.func @transform_6(%arg0: i32) -> (i32, i32) {
    %c0_i32 = arith.constant 0 : i32
    %c0_i32_0 = arith.constant 0 : i32
    %c0_i32_1 = arith.constant 0 : i32
    return %c0_i32, %c0_i32_0 : i32, i32
  }
  func.func @transform_7(%arg0: i32) -> (i32, i32) {
    %c0_i32 = arith.constant 0 : i32
    %c0_i32_0 = arith.constant 0 : i32
    %c0_i32_1 = arith.constant 0 : i32
    return %c0_i32, %c0_i32_0 : i32, i32
  }
  func.func @transform_8(%arg0: i32) -> (i32, i32) {
    %c0_i32 = arith.constant 0 : i32
    %c0_i32_0 = arith.constant 0 : i32
    %c0_i32_1 = arith.constant 0 : i32
    return %c0_i32, %c0_i32_0 : i32, i32
  }
  func.func @transform_9(%arg0: i32) -> (i32, i32) {
    %c0_i32 = arith.constant 0 : i32
    %c0_i32_0 = arith.constant 0 : i32
    %c0_i32_1 = arith.constant 0 : i32
    return %c0_i32, %c0_i32_0 : i32, i32
  }
}

</mosaic_0001>

<llo_original>
// kernel: tpu_custom_call.1
$region0: #{tpu_custom_call.1}
  #allocation0 [shape = 'u32[]', space=smem, size = 0x4, offset = 0x4, fixed_abs, tag = 'smem constant byte address 0x4 - core index']
  #allocation1 [shape = 'u32[144,128]{1,0:T(1,128)}', space=vmem, size = 0x12000, scoped, tag = 'internal scratch']
  #allocation2 [shape = 'f32[16,32]{1,0:T(8,128)}', space=vmem, size = 0x2000, scoped, tag = 'scratch operand']
  %s0 = inlined_call_operand.hbm [shape: f32[16,32], index: 0, kind: input, shape index: {}]
  %s1 = inlined_call_operand.hbm [shape: f32[32,32], index: 1, kind: input, shape index: {}]
  %s2 = inlined_call_operand.hbm [shape: f32[32,32], index: 2, kind: input, shape index: {}]
  %s3 = inlined_call_operand.hbm [shape: f32[32,32], index: 3, kind: input, shape index: {}]
  %s4 = inlined_call_operand.vmem [shape: f32[1,32], index: 4, kind: input, shape index: {}]
  %s5 = inlined_call_operand.vmem [shape: f32[1,32], index: 5, kind: input, shape index: {}]
  %s6 = inlined_call_operand.vmem [shape: f32[1,32], index: 6, kind: input, shape index: {}]
  %s7 = inlined_call_operand.hbm [shape: f32[32,32], index: 7, kind: input, shape index: {}]
  %s8 = inlined_call_operand.vmem [shape: f32[1,32], index: 8, kind: input, shape index: {}]
  %s9 = inlined_call_operand.hbm [shape: f32[16,32], index: 9, kind: output, shape index: {}]
  %s10 = sld [smem:[#allocation0]]
  $region66: #{tpu_custom_call.1} parent=0
    _
  %s12 = ssub.s32 1, %s10
  %s13 = scalar_select 0, %s12, %s10
  $region1: #{tpu_custom_call.1} parent=0
    #allocation3 [shape = 'u8[8192]{0}', space=vmem, size = 0x2000, scoped, tag = 'input window, operand 0, single buffered']
    #allocation4 [shape = 's32[1]{0}', space=sflag, size = 0x4, scoped, tag = 'scoped memory for tpu_custom_call.1']
    #allocation5 [shape = 's32[1]{0}', space=sflag, size = 0x4, scoped, tag = 'scoped memory for tpu_custom_call.1']
    #allocation6 [shape = 'u8[16384]{0}', space=vmem, size = 0x4000, scoped, tag = 'input window, operand 1, single buffered']
    #allocation7 [shape = 's32[1]{0}', space=sflag, size = 0x4, scoped, tag = 'scoped memory for tpu_custom_call.1']
    #allocation8 [shape = 'u8[16384]{0}', space=vmem, size = 0x4000, scoped, tag = 'input window, operand 2, single buffered']
    #allocation9 [shape = 'u8[16384]{0}', space=vmem, size = 0x4000, scoped, tag = 'input window, operand 3, single buffered']
    #allocation10 [shape = 's32[1]{0}', space=sflag, size = 0x4, scoped, tag = 'scoped memory for tpu_custom_call.1']
    #allocation11 [shape = 'u8[16384]{0}', space=vmem, size = 0x4000, scoped, tag = 'input window, operand 7, single buffered']
    #allocation12 [shape = 'u8[8192]{0}', space=vmem, size = 0x2000, scoped, tag = 'output window, operand 0, single buffered']
    %14 = vsyncpa [#allocation4], 0
    %15 = vsyncpa [#allocation7], 0
    %16 = vsyncpa [#allocation10], 0
    %17 = vsyncpa [#allocation5], 0
    // Predicated region
    $region2: #{tpu_custom_call.1} parent=1 // pred_check
      _
    $region3: #{tpu_custom_call.1} parent=1 // pred_check_branch
      %19 = sbr.rel (0) target = $region5
    $region4: #{tpu_custom_call.1} parent=1 // pred_region
      %s21 = ssub.s32 256, 256
      %22 = vsyncadd [#allocation4], %s21
      %s23 = sshll.u32 [#allocation3], 4
      %s24 = int_to_ptr.vmem [resolvable:$true] %s23
      %29 = dma.hbm_to_vmem [thread:$0]  %s0, 256, %s24, [#allocation4], 128, 128, 8
    $region5: #{tpu_custom_call.1} parent=1 // pred_fallthru
      _
    // Predicated region
    $region6: #{tpu_custom_call.1} parent=1 // pred_check
      _
    $region7: #{tpu_custom_call.1} parent=1 // pred_check_branch
      %31 = sbr.rel (0) target = $region9
    $region8: #{tpu_custom_call.1} parent=1 // pred_region
      %s33 = ssub.s32 512, 512
      %34 = vsyncadd [#allocation7], %s33
      %s35 = sshll.u32 [#allocation6], 4
      %s36 = int_to_ptr.vmem [resolvable:$true] %s35
      %41 = dma.hbm_to_vmem [thread:$0]  %s1, 512, %s36, [#allocation7], 128, 128, 8
    $region9: #{tpu_custom_call.1} parent=1 // pred_fallthru
      _
    // Predicated region
    $region10: #{tpu_custom_call.1} parent=1 // pred_check
      _
    $region11: #{tpu_custom_call.1} parent=1 // pred_check_branch
      %43 = sbr.rel (0) target = $region13
    $region12: #{tpu_custom_call.1} parent=1 // pred_region
      %s45 = ssub.s32 512, 512
      %46 = vsyncadd [#allocation7], %s45
      %s47 = sshll.u32 [#allocation8], 4
      %s48 = int_to_ptr.vmem [resolvable:$true] %s47
      %53 = dma.hbm_to_vmem [thread:$0]  %s2, 512, %s48, [#allocation7], 128, 128, 8
    $region13: #{tpu_custom_call.1} parent=1 // pred_fallthru
      _
    // Predicated region
    $region14: #{tpu_custom_call.1} parent=1 // pred_check
      _
    $region15: #{tpu_custom_call.1} parent=1 // pred_check_branch
      %55 = sbr.rel (0) target = $region17
    $region16: #{tpu_custom_call.1} parent=1 // pred_region
      %s57 = ssub.s32 512, 512
      %58 = vsyncadd [#allocation10], %s57
      %s59 = sshll.u32 [#allocation9], 4
      %s60 = int_to_ptr.vmem [resolvable:$true] %s59
      %65 = dma.hbm_to_vmem [thread:$0]  %s3, 512, %s60, [#allocation10], 128, 128, 8
    $region17: #{tpu_custom_call.1} parent=1 // pred_fallthru
      _
    // Predicated region
    $region18: #{tpu_custom_call.1} parent=1 // pred_check
      _
    $region19: #{tpu_custom_call.1} parent=1 // pred_check_branch
      %67 = sbr.rel (0) target = $region21
    $region20: #{tpu_custom_call.1} parent=1 // pred_region
      _
    $region21: #{tpu_custom_call.1} parent=1 // pred_fallthru
      _
    // Predicated region
    $region22: #{tpu_custom_call.1} parent=1 // pred_check
      _
    $region23: #{tpu_custom_call.1} parent=1 // pred_check_branch
      %69 = sbr.rel (0) target = $region25
    $region24: #{tpu_custom_call.1} parent=1 // pred_region
      _
    $region25: #{tpu_custom_call.1} parent=1 // pred_fallthru
      _
    // Predicated region
    $region26: #{tpu_custom_call.1} parent=1 // pred_check
      _
    $region27: #{tpu_custom_call.1} parent=1 // pred_check_branch
      %71 = sbr.rel (0) target = $region29
    $region28: #{tpu_custom_call.1} parent=1 // pred_region
      _
    $region29: #{tpu_custom_call.1} parent=1 // pred_fallthru
      _
    // Predicated region
    $region30: #{tpu_custom_call.1} parent=1 // pred_check
      _
    $region31: #{tpu_custom_call.1} parent=1 // pred_check_branch
      %73 = sbr.rel (0) target = $region33
    $region32: #{tpu_custom_call.1} parent=1 // pred_region
      %s75 = ssub.s32 512, 512
      %76 = vsyncadd [#allocation10], %s75
      %s77 = sshll.u32 [#allocation11], 4
      %s78 = int_to_ptr.vmem [resolvable:$true] %s77
      %83 = dma.hbm_to_vmem [thread:$0]  %s7, 512, %s78, [#allocation10], 128, 128, 8
    $region33: #{tpu_custom_call.1} parent=1 // pred_fallthru
      _
    // Predicated region
    $region34: #{tpu_custom_call.1} parent=1 // pred_check
      _
    $region35: #{tpu_custom_call.1} parent=1 // pred_check_branch
      %85 = sbr.rel (0) target = $region37
    $region36: #{tpu_custom_call.1} parent=1 // pred_region
      _
    $region37: #{tpu_custom_call.1} parent=1 // pred_fallthru
      _
    // Predicated region
    $region38: #{tpu_custom_call.1} parent=1 // pred_check
      _
    $region39: #{tpu_custom_call.1} parent=1 // pred_check_branch
      %87 = sbr.rel (0) target = $region41
    $region40: #{tpu_custom_call.1} parent=1 // pred_region
      %88 = dma.done [#allocation4], 256
    $region41: #{tpu_custom_call.1} parent=1 // pred_fallthru
      _
    // Predicated region
    $region42: #{tpu_custom_call.1} parent=1 // pred_check
      _
    $region43: #{tpu_custom_call.1} parent=1 // pred_check_branch
      %90 = sbr.rel (0) target = $region45
    $region44: #{tpu_custom_call.1} parent=1 // pred_region
      %91 = dma.done [#allocation7], 512
    $region45: #{tpu_custom_call.1} parent=1 // pred_fallthru
      _
    // Predicated region
    $region46: #{tpu_custom_call.1} parent=1 // pred_check
      _
    $region47: #{tpu_custom_call.1} parent=1 // pred_check_branch
      %93 = sbr.rel (0) target = $region49
    $region48: #{tpu_custom_call.1} parent=1 // pred_region
      %94 = dma.done [#allocation7], 512
    $region49: #{tpu_custom_call.1} parent=1 // pred_fallthru
      _
    // Predicated region
    $region50: #{tpu_custom_call.1} parent=1 // pred_check
      _
    $region51: #{tpu_custom_call.1} parent=1 // pred_check_branch
      %96 = sbr.rel (0) target = $region53
    $region52: #{tpu_custom_call.1} parent=1 // pred_region
      %97 = dma.done [#allocation10], 512
    $region53: #{tpu_custom_call.1} parent=1 // pred_fallthru
      _
    // Predicated region
    $region54: #{tpu_custom_call.1} parent=1 // pred_check
      _
    $region55: #{tpu_custom_call.1} parent=1 // pred_check_branch
      %99 = sbr.rel (0) target = $region57
    $region56: #{tpu_custom_call.1} parent=1 // pred_region
      %100 = dma.done [#allocation10], 512
    $region57: #{tpu_custom_call.1} parent=1 // pred_fallthru
      _
    %v101 = vld [vmem:[#allocation3] sm:$0xff]
    %v102 = vld [vmem:[#allocation3 + $0x8] sm:$0xff]
    %v103 = vld [vmem:[#allocation6] sm:$0xff]
    %v104 = vld [vmem:[#allocation6 + $0x8] sm:$0xff]
    %v105 = vld [vmem:[#allocation6 + $0x10] sm:$0xff]
    %v106 = vld [vmem:[#allocation6 + $0x18] sm:$0xff]
    %v107 = vld [vmem:[%s4] sm:$0x1]
    %v109 = vlaneseq
    %v110 = vshrl.u32 %v109, 7
    %v111 = vsub.s32 0, %v110
    %v112 = vrot.slane %v107, %v111
    %vm114 = vcmask 261120
    %v116 = vsel %vm114, %v101, 0
    %v119 = vsel %vm114, %v102, 0
    %121 = vmatprep.subr.mxu0 0.0
    %122 = vmatpush1.msra.mxu0 0.0
    %123 = vmatprep.subr.mxu0 0.0
    %124 = vmatpush1.msra.mxu0 0.0
    %125 = vmatprep.subr.mxu0 0.0
    %126 = vmatpush1.msra.mxu0 0.0
    %127 = vmatprep.subr.mxu0 0.0
    %128 = vmatpush1.msra.mxu0 0.0
    %129 = vmatprep.subr.mxu0 0.0
    %130 = vmatpush1.msra.mxu0 0.0
    %131 = vmatprep.subr.mxu0 0.0
    %132 = vmatpush1.msra.mxu0 0.0
    %133 = vmatprep.subr.mxu0 0.0
    %134 = vmatpush1.msra.mxu0 0.0
    %135 = vmatprep.subr.mxu0 0.0
    %136 = vmatpush1.msra.mxu0 0.0
    %137 = vmatprep.subr.mxu0 0.0
    %138 = vmatpush1.msra.mxu0 0.0
    %139 = vmatprep.subr.mxu0 0.0
    %140 = vmatpush1.msra.mxu0 0.0
    %141 = vmatprep.subr.mxu0 0.0
    %142 = vmatpush1.msra.mxu0 0.0
    %143 = vmatprep.subr.mxu0 0.0
    %144 = vmatpush1.msra.mxu0 0.0
    %145 = vmatprep.subr.mxu0 0.0
    %146 = vmatpush1.msra.mxu0 %v106
    %147 = vmatprep.subr.mxu0 0.0
    %148 = vmatpush1.msra.mxu0 %v105
    %149 = vmatprep.subr.mxu0 0.0
    %150 = vmatpush1.msra.mxu0 %v104
    %151 = vmatprep.subr.mxu0 0.0
    %152 = vmatpush1.msra.mxu0 %v103
    %153 = vmatprep.subr.mxu0 0.0
    %154 = vmatpush2.msra.mxu0 0.0
    %155 = vmatprep.subr.mxu0 0.0
    %156 = vmatpush2.msra.mxu0 0.0
    %157 = vmatprep.subr.mxu0 0.0
    %158 = vmatpush2.msra.mxu0 0.0
    %159 = vmatprep.subr.mxu0 0.0
    %160 = vmatpush2.msra.mxu0 0.0
    %161 = vmatprep.subr.mxu0 0.0
    %162 = vmatpush2.msra.mxu0 0.0
    %163 = vmatprep.subr.mxu0 0.0
    %164 = vmatpush2.msra.mxu0 0.0
    %165 = vmatprep.subr.mxu0 0.0
    %166 = vmatpush2.msra.mxu0 0.0
    %167 = vmatprep.subr.mxu0 0.0
    %168 = vmatpush2.msra.mxu0 0.0
    %169 = vmatprep.subr.mxu0 0.0
    %170 = vmatpush2.msra.mxu0 0.0
    %171 = vmatprep.subr.mxu0 0.0
    %172 = vmatpush2.msra.mxu0 0.0
    %173 = vmatprep.subr.mxu0 0.0
    %174 = vmatpush2.msra.mxu0 0.0
    %175 = vmatprep.subr.mxu0 0.0
    %176 = vmatpush2.msra.mxu0 0.0
    %177 = vmatprep.subr.mxu0 0.0
    %178 = vmatpush2.msra.mxu0 0.0
    %179 = vmatprep.subr.mxu0 0.0
    %180 = vmatpush2.msra.mxu0 0.0
    %181 = vmatprep.subr.mxu0 0.0
    %182 = vmatpush2.msra.mxu0 0.0
    %183 = vmatprep.subr.mxu0 0.0
    %184 = vmatpush2.msra.mxu0 0.0
    %185 = vmatprep.mubr.f32.mxu0 0.0
    %186 = vmatmul.mubr.f32.gmra.mxu0 %v116
    %v187 = vpop.f32.mrf.mxu0
    %v188 = vadd.f32 %v112, %v187
    %v189 = vpop.f32.mrf.mxu0
    %190 = vmatprep.mubr.f32.mxu0 0.0
    %191 = vmatmul.mubr.f32.gmra.mxu0 %v119
    %v192 = vpop.f32.mrf.mxu0
    %v193 = vadd.f32 %v112, %v192
    %v194 = vpop.f32.mrf.mxu0
    %195 = vdwg.mxu0
    %v196 = vld [vmem:[#allocation8] sm:$0xff]
    %v197 = vld [vmem:[#allocation8 + $0x8] sm:$0xff]
    %v198 = vld [vmem:[#allocation8 + $0x10] sm:$0xff]
    %v199 = vld [vmem:[#allocation8 + $0x18] sm:$0xff]
    %v200 = vld [vmem:[%s5] sm:$0x1]
    %v202 = vlaneseq
    %v203 = vshrl.u32 %v202, 7
    %v204 = vsub.s32 0, %v203
    %v205 = vrot.slane %v200, %v204
    %207 = vmatprep.subr.mxu0 0.0
    %208 = vmatpush1.msra.mxu0 0.0
    %209 = vmatprep.subr.mxu0 0.0
    %210 = vmatpush1.msra.mxu0 0.0
    %211 = vmatprep.subr.mxu0 0.0
    %212 = vmatpush1.msra.mxu0 0.0
    %213 = vmatprep.subr.mxu0 0.0
    %214 = vmatpush1.msra.mxu0 0.0
    %215 = vmatprep.subr.mxu0 0.0
    %216 = vmatpush1.msra.mxu0 0.0
    %217 = vmatprep.subr.mxu0 0.0
    %218 = vmatpush1.msra.mxu0 0.0
    %219 = vmatprep.subr.mxu0 0.0
    %220 = vmatpush1.msra.mxu0 0.0
    %221 = vmatprep.subr.mxu0 0.0
    %222 = vmatpush1.msra.mxu0 0.0
    %223 = vmatprep.subr.mxu0 0.0
    %224 = vmatpush1.msra.mxu0 0.0
    %225 = vmatprep.subr.mxu0 0.0
    %226 = vmatpush1.msra.mxu0 0.0
    %227 = vmatprep.subr.mxu0 0.0
    %228 = vmatpush1.msra.mxu0 0.0
    %229 = vmatprep.subr.mxu0 0.0
    %230 = vmatpush1.msra.mxu0 0.0
    %231 = vmatprep.subr.mxu0 0.0
    %232 = vmatpush1.msra.mxu0 %v199
    %233 = vmatprep.subr.mxu0 0.0
    %234 = vmatpush1.msra.mxu0 %v198
    %235 = vmatprep.subr.mxu0 0.0
    %236 = vmatpush1.msra.mxu0 %v197
    %237 = vmatprep.subr.mxu0 0.0
    %238 = vmatpush1.msra.mxu0 %v196
    %239 = vmatprep.subr.mxu0 0.0
    %240 = vmatpush2.msra.mxu0 0.0
    %241 = vmatprep.subr.mxu0 0.0
    %242 = vmatpush2.msra.mxu0 0.0
    %243 = vmatprep.subr.mxu0 0.0
    %244 = vmatpush2.msra.mxu0 0.0
    %245 = vmatprep.subr.mxu0 0.0
    %246 = vmatpush2.msra.mxu0 0.0
    %247 = vmatprep.subr.mxu0 0.0
    %248 = vmatpush2.msra.mxu0 0.0
    %249 = vmatprep.subr.mxu0 0.0
    %250 = vmatpush2.msra.mxu0 0.0
    %251 = vmatprep.subr.mxu0 0.0
    %252 = vmatpush2.msra.mxu0 0.0
    %253 = vmatprep.subr.mxu0 0.0
    %254 = vmatpush2.msra.mxu0 0.0
    %255 = vmatprep.subr.mxu0 0.0
    %256 = vmatpush2.msra.mxu0 0.0
    %257 = vmatprep.subr.mxu0 0.0
    %258 = vmatpush2.msra.mxu0 0.0
    %259 = vmatprep.subr.mxu0 0.0
    %260 = vmatpush2.msra.mxu0 0.0
    %261 = vmatprep.subr.mxu0 0.0
    %262 = vmatpush2.msra.mxu0 0.0
    %263 = vmatprep.subr.mxu0 0.0
    %264 = vmatpush2.msra.mxu0 0.0
    %265 = vmatprep.subr.mxu0 0.0
    %266 = vmatpush2.msra.mxu0 0.0
    %267 = vmatprep.subr.mxu0 0.0
    %268 = vmatpush2.msra.mxu0 0.0
    %269 = vmatprep.subr.mxu0 0.0
    %270 = vmatpush2.msra.mxu0 0.0
    %271 = vmatprep.mubr.f32.mxu0 0.0
    %272 = vmatmul.mubr.f32.gmra.mxu0 %v116
    %v273 = vpop.f32.mrf.mxu0
    %v274 = vadd.f32 %v205, %v273
    %v275 = vpop.f32.mrf.mxu0
    %276 = vmatprep.mubr.f32.mxu0 0.0
    %277 = vmatmul.mubr.f32.gmra.mxu0 %v119
    %v278 = vpop.f32.mrf.mxu0
    %v279 = vadd.f32 %v205, %v278
    %v280 = vpop.f32.mrf.mxu0
    %281 = vdwg.mxu0
    %v282 = vld [vmem:[#allocation9] sm:$0xff]
    %v283 = vld [vmem:[#allocation9 + $0x8] sm:$0xff]
    %v284 = vld [vmem:[#allocation9 + $0x10] sm:$0xff]
    %v285 = vld [vmem:[#allocation9 + $0x18] sm:$0xff]
    %v286 = vld [vmem:[%s6] sm:$0x1]
    %v288 = vlaneseq
    %v289 = vshrl.u32 %v288, 7
    %v290 = vsub.s32 0, %v289
    %v291 = vrot.slane %v286, %v290
    %293 = vmatprep.subr.mxu0 0.0
    %294 = vmatpush1.msra.mxu0 0.0
    %295 = vmatprep.subr.mxu0 0.0
    %296 = vmatpush1.msra.mxu0 0.0
    %297 = vmatprep.subr.mxu0 0.0
    %298 = vmatpush1.msra.mxu0 0.0
    %299 = vmatprep.subr.mxu0 0.0
    %300 = vmatpush1.msra.mxu0 0.0
    %301 = vmatprep.subr.mxu0 0.0
    %302 = vmatpush1.msra.mxu0 0.0
    %303 = vmatprep.subr.mxu0 0.0
    %304 = vmatpush1.msra.mxu0 0.0
    %305 = vmatprep.subr.mxu0 0.0
    %306 = vmatpush1.msra.mxu0 0.0
    %307 = vmatprep.subr.mxu0 0.0
    %308 = vmatpush1.msra.mxu0 0.0
    %309 = vmatprep.subr.mxu0 0.0
    %310 = vmatpush1.msra.mxu0 0.0
    %311 = vmatprep.subr.mxu0 0.0
    %312 = vmatpush1.msra.mxu0 0.0
    %313 = vmatprep.subr.mxu0 0.0
    %314 = vmatpush1.msra.mxu0 0.0
    %315 = vmatprep.subr.mxu0 0.0
    %316 = vmatpush1.msra.mxu0 0.0
    %317 = vmatprep.subr.mxu0 0.0
    %318 = vmatpush1.msra.mxu0 %v285
    %319 = vmatprep.subr.mxu0 0.0
    %320 = vmatpush1.msra.mxu0 %v284
    %321 = vmatprep.subr.mxu0 0.0
    %322 = vmatpush1.msra.mxu0 %v283
    %323 = vmatprep.subr.mxu0 0.0
    %324 = vmatpush1.msra.mxu0 %v282
    %325 = vmatprep.subr.mxu0 0.0
    %326 = vmatpush2.msra.mxu0 0.0
    %327 = vmatprep.subr.mxu0 0.0
    %328 = vmatpush2.msra.mxu0 0.0
    %329 = vmatprep.subr.mxu0 0.0
    %330 = vmatpush2.msra.mxu0 0.0
    %331 = vmatprep.subr.mxu0 0.0
    %332 = vmatpush2.msra.mxu0 0.0
    %333 = vmatprep.subr.mxu0 0.0
    %334 = vmatpush2.msra.mxu0 0.0
    %335 = vmatprep.subr.mxu0 0.0
    %336 = vmatpush2.msra.mxu0 0.0
    %337 = vmatprep.subr.mxu0 0.0
    %338 = vmatpush2.msra.mxu0 0.0
    %339 = vmatprep.subr.mxu0 0.0
    %340 = vmatpush2.msra.mxu0 0.0
    %341 = vmatprep.subr.mxu0 0.0
    %342 = vmatpush2.msra.mxu0 0.0
    %343 = vmatprep.subr.mxu0 0.0
    %344 = vmatpush2.msra.mxu0 0.0
    %345 = vmatprep.subr.mxu0 0.0
    %346 = vmatpush2.msra.mxu0 0.0
    %347 = vmatprep.subr.mxu0 0.0
    %348 = vmatpush2.msra.mxu0 0.0
    %349 = vmatprep.subr.mxu0 0.0
    %350 = vmatpush2.msra.mxu0 0.0
    %351 = vmatprep.subr.mxu0 0.0
    %352 = vmatpush2.msra.mxu0 0.0
    %353 = vmatprep.subr.mxu0 0.0
    %354 = vmatpush2.msra.mxu0 0.0
    %355 = vmatprep.subr.mxu0 0.0
    %356 = vmatpush2.msra.mxu0 0.0
    %357 = vmatprep.mubr.f32.mxu0 0.0
    %358 = vmatmul.mubr.f32.gmra.mxu0 %v116
    %v359 = vpop.f32.mrf.mxu0
    %v360 = vadd.f32 %v291, %v359
    %v361 = vpop.f32.mrf.mxu0
    %362 = vmatprep.mubr.f32.mxu0 0.0
    %363 = vmatmul.mubr.f32.gmra.mxu0 %v119
    %v364 = vpop.f32.mrf.mxu0
    %v365 = vadd.f32 %v291, %v364
    %v366 = vpop.f32.mrf.mxu0
    %367 = vdwg.mxu0
    %v369 = vsel %vm114, %v188, 0
    %v372 = vsel %vm114, %v274, 0
    %374 = vmatprep.subr.mxu0 0.0
    %375 = vmatpush1.xpose.msra.mxu0 0.0
    %376 = vmatprep.subr.mxu0 0.0
    %377 = vmatpush1.xpose.msra.mxu0 0.0
    %378 = vmatprep.subr.mxu0 0.0
    %379 = vmatpush1.xpose.msra.mxu0 0.0
    %380 = vmatprep.subr.mxu0 0.0
    %381 = vmatpush1.xpose.msra.mxu0 0.0
    %382 = vmatprep.subr.mxu0 0.0
    %383 = vmatpush1.xpose.msra.mxu0 0.0
    %384 = vmatprep.subr.mxu0 0.0
    %385 = vmatpush1.xpose.msra.mxu0 0.0
    %386 = vmatprep.subr.mxu0 0.0
    %387 = vmatpush1.xpose.msra.mxu0 0.0
    %388 = vmatprep.subr.mxu0 0.0
    %389 = vmatpush1.xpose.msra.mxu0 0.0
    %390 = vmatprep.subr.mxu0 0.0
    %391 = vmatpush1.xpose.msra.mxu0 0.0
    %392 = vmatprep.subr.mxu0 0.0
    %393 = vmatpush1.xpose.msra.mxu0 0.0
    %394 = vmatprep.subr.mxu0 0.0
    %395 = vmatpush1.xpose.msra.mxu0 0.0
    %396 = vmatprep.subr.mxu0 0.0
    %397 = vmatpush1.xpose.msra.mxu0 0.0
    %398 = vmatprep.subr.mxu0 0.0
    %399 = vmatpush1.xpose.msra.mxu0 0.0
    %400 = vmatprep.subr.mxu0 0.0
    %401 = vmatpush1.xpose.msra.mxu0 0.0
    %402 = vmatprep.subr.mxu0 0.0
    %403 = vmatpush1.xpose.msra.mxu0 0.0
    %404 = vmatprep.subr.mxu0 0.0
    %405 = vmatpush1.xpose.msra.mxu0 %v372
    %406 = vmatprep.subr.mxu0 0.0
    %407 = vmatpush2.xpose.msra.mxu0 0.0
    %408 = vmatprep.subr.mxu0 0.0
    %409 = vmatpush2.xpose.msra.mxu0 0.0
    %410 = vmatprep.subr.mxu0 0.0
    %411 = vmatpush2.xpose.msra.mxu0 0.0
    %412 = vmatprep.subr.mxu0 0.0
    %413 = vmatpush2.xpose.msra.mxu0 0.0
    %414 = vmatprep.subr.mxu0 0.0
    %415 = vmatpush2.xpose.msra.mxu0 0.0
    %416 = vmatprep.subr.mxu0 0.0
    %417 = vmatpush2.xpose.msra.mxu0 0.0
    %418 = vmatprep.subr.mxu0 0.0
    %419 = vmatpush2.xpose.msra.mxu0 0.0
    %420 = vmatprep.subr.mxu0 0.0
    %421 = vmatpush2.xpose.msra.mxu0 0.0
    %422 = vmatprep.subr.mxu0 0.0
    %423 = vmatpush2.xpose.msra.mxu0 0.0
    %424 = vmatprep.subr.mxu0 0.0
    %425 = vmatpush2.xpose.msra.mxu0 0.0
    %426 = vmatprep.subr.mxu0 0.0
    %427 = vmatpush2.xpose.msra.mxu0 0.0
    %428 = vmatprep.subr.mxu0 0.0
    %429 = vmatpush2.xpose.msra.mxu0 0.0
    %430 = vmatprep.subr.mxu0 0.0
    %431 = vmatpush2.xpose.msra.mxu0 0.0
    %432 = vmatprep.subr.mxu0 0.0
    %433 = vmatpush2.xpose.msra.mxu0 0.0
    %434 = vmatprep.subr.mxu0 0.0
    %435 = vmatpush2.xpose.msra.mxu0 0.0
    %436 = vmatprep.subr.mxu0 0.0
    %437 = vmatpush2.xpose.msra.mxu0 0.0
    %438 = vmatprep.mubr.f32.mxu0 0.0
    %439 = vmatmul.mubr.f32.gmra.mxu0 %v369
    %v440 = vpop.f32.mrf.mxu0
    %v441 = vadd.f32 0.0, %v440
    %v442 = vpop.f32.mrf.mxu0
    %443 = vdwg.mxu0
    %v444 = vmul.f32 %v441, 0.17677669
    %vm445 = vcmask 64512
    %v446 = vsel %vm445, %v444, -inf
    %447 = vmax.xlane.f32.xlu0 %v446
    %v448 = vpop.xlane.xlu0 %447
    %v449 = vsub.f32 %v444, %v448
    %v450 = vmul.f32 %v449, 1.442695
    %v451 = vpow.pop %v450
    %v452 = vsel %vm445, %v451, 0.0
    %453 = vadd.xlane.f32.xlu0 %v452
    %v454 = vpop.xlane.xlu0 %453
    %v455 = vrcp.pop %v454
    %v456 = vmul.f32 %v451, %v455
    %v458 = vsel %vm445, %v456, 0
    %460 = vmatprep.subr.mxu0 0.0
    %461 = vmatpush1.msra.mxu0 0.0
    %462 = vmatprep.subr.mxu0 0.0
    %463 = vmatpush1.msra.mxu0 0.0
    %464 = vmatprep.subr.mxu0 0.0
    %465 = vmatpush1.msra.mxu0 0.0
    %466 = vmatprep.subr.mxu0 0.0
    %467 = vmatpush1.msra.mxu0 0.0
    %468 = vmatprep.subr.mxu0 0.0
    %469 = vmatpush1.msra.mxu0 0.0
    %470 = vmatprep.subr.mxu0 0.0
    %471 = vmatpush1.msra.mxu0 0.0
    %472 = vmatprep.subr.mxu0 0.0
    %473 = vmatpush1.msra.mxu0 0.0
    %474 = vmatprep.subr.mxu0 0.0
    %475 = vmatpush1.msra.mxu0 0.0
    %476 = vmatprep.subr.mxu0 0.0
    %477 = vmatpush1.msra.mxu0 0.0
    %478 = vmatprep.subr.mxu0 0.0
    %479 = vmatpush1.msra.mxu0 0.0
    %480 = vmatprep.subr.mxu0 0.0
    %481 = vmatpush1.msra.mxu0 0.0
    %482 = vmatprep.subr.mxu0 0.0
    %483 = vmatpush1.msra.mxu0 0.0
    %484 = vmatprep.subr.mxu0 0.0
    %485 = vmatpush1.msra.mxu0 0.0
    %486 = vmatprep.subr.mxu0 0.0
    %487 = vmatpush1.msra.mxu0 0.0
    %488 = vmatprep.subr.mxu0 0.0
    %489 = vmatpush1.msra.mxu0 0.0
    %490 = vmatprep.subr.mxu0 0.0
    %491 = vmatpush1.msra.mxu0 %v360
    %492 = vmatprep.subr.mxu0 0.0
    %493 = vmatpush2.msra.mxu0 0.0
    %494 = vmatprep.subr.mxu0 0.0
    %495 = vmatpush2.msra.mxu0 0.0
    %496 = vmatprep.subr.mxu0 0.0
    %497 = vmatpush2.msra.mxu0 0.0
    %498 = vmatprep.subr.mxu0 0.0
    %499 = vmatpush2.msra.mxu0 0.0
    %500 = vmatprep.subr.mxu0 0.0
    %501 = vmatpush2.msra.mxu0 0.0
    %502 = vmatprep.subr.mxu0 0.0
    %503 = vmatpush2.msra.mxu0 0.0
    %504 = vmatprep.subr.mxu0 0.0
    %505 = vmatpush2.msra.mxu0 0.0
    %506 = vmatprep.subr.mxu0 0.0
    %507 = vmatpush2.msra.mxu0 0.0
    %508 = vmatprep.subr.mxu0 0.0
    %509 = vmatpush2.msra.mxu0 0.0
    %510 = vmatprep.subr.mxu0 0.0
    %511 = vmatpush2.msra.mxu0 0.0
    %512 = vmatprep.subr.mxu0 0.0
    %513 = vmatpush2.msra.mxu0 0.0
    %514 = vmatprep.subr.mxu0 0.0
    %515 = vmatpush2.msra.mxu0 0.0
    %516 = vmatprep.subr.mxu0 0.0
    %517 = vmatpush2.msra.mxu0 0.0
    %518 = vmatprep.subr.mxu0 0.0
    %519 = vmatpush2.msra.mxu0 0.0
    %520 = vmatprep.subr.mxu0 0.0
    %521 = vmatpush2.msra.mxu0 0.0
    %522 = vmatprep.subr.mxu0 0.0
    %523 = vmatpush2.msra.mxu0 0.0
    %524 = vmatprep.mubr.f32.mxu0 0.0
    %525 = vmatmul.mubr.f32.gmra.mxu0 %v458
    %v526 = vpop.f32.mrf.mxu0
    %v527 = vadd.f32 0.0, %v526
    %v528 = vpop.f32.mrf.mxu0
    %529 = vdwg.mxu0
    %530 = vst.msk [vmem:[#allocation2] sm:$0xff] %vm114, %v527
    %v532 = vsel %vm114, %v193, 0
    %v535 = vsel %vm114, %v279, 0
    %537 = vmatprep.subr.mxu0 0.0
    %538 = vmatpush1.xpose.msra.mxu0 0.0
    %539 = vmatprep.subr.mxu0 0.0
    %540 = vmatpush1.xpose.msra.mxu0 0.0
    %541 = vmatprep.subr.mxu0 0.0
    %542 = vmatpush1.xpose.msra.mxu0 0.0
    %543 = vmatprep.subr.mxu0 0.0
    %544 = vmatpush1.xpose.msra.mxu0 0.0
    %545 = vmatprep.subr.mxu0 0.0
    %546 = vmatpush1.xpose.msra.mxu0 0.0
    %547 = vmatprep.subr.mxu0 0.0
    %548 = vmatpush1.xpose.msra.mxu0 0.0
    %549 = vmatprep.subr.mxu0 0.0
    %550 = vmatpush1.xpose.msra.mxu0 0.0
    %551 = vmatprep.subr.mxu0 0.0
    %552 = vmatpush1.xpose.msra.mxu0 0.0
    %553 = vmatprep.subr.mxu0 0.0
    %554 = vmatpush1.xpose.msra.mxu0 0.0
    %555 = vmatprep.subr.mxu0 0.0
    %556 = vmatpush1.xpose.msra.mxu0 0.0
    %557 = vmatprep.subr.mxu0 0.0
    %558 = vmatpush1.xpose.msra.mxu0 0.0
    %559 = vmatprep.subr.mxu0 0.0
    %560 = vmatpush1.xpose.msra.mxu0 0.0
    %561 = vmatprep.subr.mxu0 0.0
    %562 = vmatpush1.xpose.msra.mxu0 0.0
    %563 = vmatprep.subr.mxu0 0.0
    %564 = vmatpush1.xpose.msra.mxu0 0.0
    %565 = vmatprep.subr.mxu0 0.0
    %566 = vmatpush1.xpose.msra.mxu0 0.0
    %567 = vmatprep.subr.mxu0 0.0
    %568 = vmatpush1.xpose.msra.mxu0 %v535
    %569 = vmatprep.subr.mxu0 0.0
    %570 = vmatpush2.xpose.msra.mxu0 0.0
    %571 = vmatprep.subr.mxu0 0.0
    %572 = vmatpush2.xpose.msra.mxu0 0.0
    %573 = vmatprep.subr.mxu0 0.0
    %574 = vmatpush2.xpose.msra.mxu0 0.0
    %575 = vmatprep.subr.mxu0 0.0
    %576 = vmatpush2.xpose.msra.mxu0 0.0
    %577 = vmatprep.subr.mxu0 0.0
    %578 = vmatpush2.xpose.msra.mxu0 0.0
    %579 = vmatprep.subr.mxu0 0.0
    %580 = vmatpush2.xpose.msra.mxu0 0.0
    %581 = vmatprep.subr.mxu0 0.0
    %582 = vmatpush2.xpose.msra.mxu0 0.0
    %583 = vmatprep.subr.mxu0 0.0
    %584 = vmatpush2.xpose.msra.mxu0 0.0
    %585 = vmatprep.subr.mxu0 0.0
    %586 = vmatpush2.xpose.msra.mxu0 0.0
    %587 = vmatprep.subr.mxu0 0.0
    %588 = vmatpush2.xpose.msra.mxu0 0.0
    %589 = vmatprep.subr.mxu0 0.0
    %590 = vmatpush2.xpose.msra.mxu0 0.0
    %591 = vmatprep.subr.mxu0 0.0
    %592 = vmatpush2.xpose.msra.mxu0 0.0
    %593 = vmatprep.subr.mxu0 0.0
    %594 = vmatpush2.xpose.msra.mxu0 0.0
    %595 = vmatprep.subr.mxu0 0.0
    %596 = vmatpush2.xpose.msra.mxu0 0.0
    %597 = vmatprep.subr.mxu0 0.0
    %598 = vmatpush2.xpose.msra.mxu0 0.0
    %599 = vmatprep.subr.mxu0 0.0
    %600 = vmatpush2.xpose.msra.mxu0 0.0
    %601 = vmatprep.mubr.f32.mxu0 0.0
    %602 = vmatmul.mubr.f32.gmra.mxu0 %v532
    %v603 = vpop.f32.mrf.mxu0
    %v604 = vadd.f32 0.0, %v603
    %v605 = vpop.f32.mrf.mxu0
    %606 = vdwg.mxu0
    %v607 = vmul.f32 %v604, 0.17677669
    %v608 = vsel %vm445, %v607, -inf
    %609 = vmax.xlane.f32.xlu0 %v608
    %v610 = vpop.xlane.xlu0 %609
    %v611 = vsub.f32 %v607, %v610
    %v612 = vmul.f32 %v611, 1.442695
    %v613 = vpow.pop %v612
    %v614 = vsel %vm445, %v613, 0.0
    %615 = vadd.xlane.f32.xlu0 %v614
    %v616 = vpop.xlane.xlu0 %615
    %v617 = vrcp.pop %v616
    %v618 = vmul.f32 %v613, %v617
    %v620 = vsel %vm445, %v618, 0
    %622 = vmatprep.subr.mxu0 0.0
    %623 = vmatpush1.msra.mxu0 0.0
    %624 = vmatprep.subr.mxu0 0.0
    %625 = vmatpush1.msra.mxu0 0.0
    %626 = vmatprep.subr.mxu0 0.0
    %627 = vmatpush1.msra.mxu0 0.0
    %628 = vmatprep.subr.mxu0 0.0
    %629 = vmatpush1.msra.mxu0 0.0
    %630 = vmatprep.subr.mxu0 0.0
    %631 = vmatpush1.msra.mxu0 0.0
    %632 = vmatprep.subr.mxu0 0.0
    %633 = vmatpush1.msra.mxu0 0.0
    %634 = vmatprep.subr.mxu0 0.0
    %635 = vmatpush1.msra.mxu0 0.0
    %636 = vmatprep.subr.mxu0 0.0
    %637 = vmatpush1.msra.mxu0 0.0
    %638 = vmatprep.subr.mxu0 0.0
    %639 = vmatpush1.msra.mxu0 0.0
    %640 = vmatprep.subr.mxu0 0.0
    %641 = vmatpush1.msra.mxu0 0.0
    %642 = vmatprep.subr.mxu0 0.0
    %643 = vmatpush1.msra.mxu0 0.0
    %644 = vmatprep.subr.mxu0 0.0
    %645 = vmatpush1.msra.mxu0 0.0
    %646 = vmatprep.subr.mxu0 0.0
    %647 = vmatpush1.msra.mxu0 0.0
    %648 = vmatprep.subr.mxu0 0.0
    %649 = vmatpush1.msra.mxu0 0.0
    %650 = vmatprep.subr.mxu0 0.0
    %651 = vmatpush1.msra.mxu0 0.0
    %652 = vmatprep.subr.mxu0 0.0
    %653 = vmatpush1.msra.mxu0 %v365
    %654 = vmatprep.subr.mxu0 0.0
    %655 = vmatpush2.msra.mxu0 0.0
    %656 = vmatprep.subr.mxu0 0.0
    %657 = vmatpush2.msra.mxu0 0.0
    %658 = vmatprep.subr.mxu0 0.0
    %659 = vmatpush2.msra.mxu0 0.0
    %660 = vmatprep.subr.mxu0 0.0
    %661 = vmatpush2.msra.mxu0 0.0
    %662 = vmatprep.subr.mxu0 0.0
    %663 = vmatpush2.msra.mxu0 0.0
    %664 = vmatprep.subr.mxu0 0.0
    %665 = vmatpush2.msra.mxu0 0.0
    %666 = vmatprep.subr.mxu0 0.0
    %667 = vmatpush2.msra.mxu0 0.0
    %668 = vmatprep.subr.mxu0 0.0
    %669 = vmatpush2.msra.mxu0 0.0
    %670 = vmatprep.subr.mxu0 0.0
    %671 = vmatpush2.msra.mxu0 0.0
    %672 = vmatprep.subr.mxu0 0.0
    %673 = vmatpush2.msra.mxu0 0.0
    %674 = vmatprep.subr.mxu0 0.0
    %675 = vmatpush2.msra.mxu0 0.0
    %676 = vmatprep.subr.mxu0 0.0
    %677 = vmatpush2.msra.mxu0 0.0
    %678 = vmatprep.subr.mxu0 0.0
    %679 = vmatpush2.msra.mxu0 0.0
    %680 = vmatprep.subr.mxu0 0.0
    %681 = vmatpush2.msra.mxu0 0.0
    %682 = vmatprep.subr.mxu0 0.0
    %683 = vmatpush2.msra.mxu0 0.0
    %684 = vmatprep.subr.mxu0 0.0
    %685 = vmatpush2.msra.mxu0 0.0
    %686 = vmatprep.mubr.f32.mxu0 0.0
    %687 = vmatmul.mubr.f32.gmra.mxu0 %v620
    %v688 = vpop.f32.mrf.mxu0
    %v689 = vadd.f32 0.0, %v688
    %v690 = vpop.f32.mrf.mxu0
    %691 = vdwg.mxu0
    %692 = vst.msk [vmem:[#allocation2 + $0x8] sm:$0xff] %vm114, %v689
    %v693 = vld [vmem:[#allocation2] sm:$0xff]
    %v694 = vld [vmem:[#allocation2 + $0x8] sm:$0xff]
    %v695 = vld [vmem:[#allocation11] sm:$0xff]
    %v696 = vld [vmem:[#allocation11 + $0x8] sm:$0xff]
    %v697 = vld [vmem:[#allocation11 + $0x10] sm:$0xff]
    %v698 = vld [vmem:[#allocation11 + $0x18] sm:$0xff]
    %v699 = vld [vmem:[%s8] sm:$0x1]
    %v701 = vlaneseq
    %v702 = vshrl.u32 %v701, 7
    %v703 = vsub.s32 0, %v702
    %v704 = vrot.slane %v699, %v703
    %v707 = vsel %vm114, %v693, 0
    %v710 = vsel %vm114, %v694, 0
    %712 = vmatprep.subr.mxu0 0.0
    %713 = vmatpush1.msra.mxu0 0.0
    %714 = vmatprep.subr.mxu0 0.0
    %715 = vmatpush1.msra.mxu0 0.0
    %716 = vmatprep.subr.mxu0 0.0
    %717 = vmatpush1.msra.mxu0 0.0
    %718 = vmatprep.subr.mxu0 0.0
    %719 = vmatpush1.msra.mxu0 0.0
    %720 = vmatprep.subr.mxu0 0.0
    %721 = vmatpush1.msra.mxu0 0.0
    %722 = vmatprep.subr.mxu0 0.0
    %723 = vmatpush1.msra.mxu0 0.0
    %724 = vmatprep.subr.mxu0 0.0
    %725 = vmatpush1.msra.mxu0 0.0
    %726 = vmatprep.subr.mxu0 0.0
    %727 = vmatpush1.msra.mxu0 0.0
    %728 = vmatprep.subr.mxu0 0.0
    %729 = vmatpush1.msra.mxu0 0.0
    %730 = vmatprep.subr.mxu0 0.0
    %731 = vmatpush1.msra.mxu0 0.0
    %732 = vmatprep.subr.mxu0 0.0
    %733 = vmatpush1.msra.mxu0 0.0
    %734 = vmatprep.subr.mxu0 0.0
    %735 = vmatpush1.msra.mxu0 0.0
    %736 = vmatprep.subr.mxu0 0.0
    %737 = vmatpush1.msra.mxu0 %v698
    %738 = vmatprep.subr.mxu0 0.0
    %739 = vmatpush1.msra.mxu0 %v697
    %740 = vmatprep.subr.mxu0 0.0
    %741 = vmatpush1.msra.mxu0 %v696
    %742 = vmatprep.subr.mxu0 0.0
    %743 = vmatpush1.msra.mxu0 %v695
    %744 = vmatprep.subr.mxu0 0.0
    %745 = vmatpush2.msra.mxu0 0.0
    %746 = vmatprep.subr.mxu0 0.0
    %747 = vmatpush2.msra.mxu0 0.0
    %748 = vmatprep.subr.mxu0 0.0
    %749 = vmatpush2.msra.mxu0 0.0
    %750 = vmatprep.subr.mxu0 0.0
    %751 = vmatpush2.msra.mxu0 0.0
    %752 = vmatprep.subr.mxu0 0.0
    %753 = vmatpush2.msra.mxu0 0.0
    %754 = vmatprep.subr.mxu0 0.0
    %755 = vmatpush2.msra.mxu0 0.0
    %756 = vmatprep.subr.mxu0 0.0
    %757 = vmatpush2.msra.mxu0 0.0
    %758 = vmatprep.subr.mxu0 0.0
    %759 = vmatpush2.msra.mxu0 0.0
    %760 = vmatprep.subr.mxu0 0.0
    %761 = vmatpush2.msra.mxu0 0.0
    %762 = vmatprep.subr.mxu0 0.0
    %763 = vmatpush2.msra.mxu0 0.0
    %764 = vmatprep.subr.mxu0 0.0
    %765 = vmatpush2.msra.mxu0 0.0
    %766 = vmatprep.subr.mxu0 0.0
    %767 = vmatpush2.msra.mxu0 0.0
    %768 = vmatprep.subr.mxu0 0.0
    %769 = vmatpush2.msra.mxu0 0.0
    %770 = vmatprep.subr.mxu0 0.0
    %771 = vmatpush2.msra.mxu0 0.0
    %772 = vmatprep.subr.mxu0 0.0
    %773 = vmatpush2.msra.mxu0 0.0
    %774 = vmatprep.subr.mxu0 0.0
    %775 = vmatpush2.msra.mxu0 0.0
    %776 = vmatprep.mubr.f32.mxu0 0.0
    %777 = vmatmul.mubr.f32.gmra.mxu0 %v707
    %v778 = vpop.f32.mrf.mxu0
    %v779 = vadd.f32 %v704, %v778
    %v780 = vpop.f32.mrf.mxu0
    %781 = vmatprep.mubr.f32.mxu0 0.0
    %782 = vmatmul.mubr.f32.gmra.mxu0 %v710
    %v783 = vpop.f32.mrf.mxu0
    %v784 = vadd.f32 %v704, %v783
    %v785 = vpop.f32.mrf.mxu0
    %786 = vdwg.mxu0
    %787 = vst.msk [vmem:[#allocation12] sm:$0xff] %vm114, %v779
    %788 = vst.msk [vmem:[#allocation12 + $0x8] sm:$0xff] %vm114, %v784
    // Predicated region
    $region58: #{tpu_custom_call.1} parent=1 // pred_check
      _
    $region59: #{tpu_custom_call.1} parent=1 // pred_check_branch
      %790 = sbr.rel (0) target = $region61
    $region60: #{tpu_custom_call.1} parent=1 // pred_region
      %s792 = ssub.s32 256, 256
      %793 = vsyncadd [#allocation5], %s792
      %s794 = sshll.u32 [#allocation12], 4
      %s795 = int_to_ptr.vmem [resolvable:$true] %s794
      %800 = dma.vmem_to_hbm [thread:$0]  %s795, 256, %s9, [#allocation5], 128, 128, 8
    $region61: #{tpu_custom_call.1} parent=1 // pred_fallthru
      _
    // Predicated region
    $region62: #{tpu_custom_call.1} parent=1 // pred_check
      _
    $region63: #{tpu_custom_call.1} parent=1 // pred_check_branch
      %802 = sbr.rel (0) target = $region65
    $region64: #{tpu_custom_call.1} parent=1 // pred_region
      %803 = dma.done [#allocation5], 256
    $region65: #{tpu_custom_call.1} parent=1 // pred_fallthru
      _
    %804 = vsyncpa [#allocation4], 1
    %805 = vsyncpa [#allocation7], 1
    %806 = vsyncpa [#allocation10], 1
    %807 = vsyncpa [#allocation5], 1

</llo_original>
